<compile_context>
chip_gen: v7x
topology: tpu7x:2x2x1
jax: 0.10.0
libtpu: 0.0.40
codegen_flags: <defaults>
</compile_context>

<pallas_src>
import math
from functools import partial

import jax
import jax.numpy as jnp
from jax.experimental import pallas as pl
from jax.experimental.pallas import tpu as pltpu

SUBLANE = 8
LANE = 128

HIDDEN = 32          # logical hidden width (matches nn.Linear(..., 32))
NUM_OUTPUTS = 2      # logical output width
HID_PAD = LANE       # hidden dim padded to one full vreg lane width

MAX_TILE_B = 2048    # max batch-tile rows (VMEM is nowhere near a constraint)


def dqn_kernel(x_ref, w1_ref, b1_ref, w2_ref, b2_ref, w3_ref, b3_ref, out_ref):
    """Fused 3-layer MLP on one (tile_b, num_inputs) activation tile.

    bf16 MXU operands with f32 accumulation; bias add / ReLU in f32 (VPU).
    """
    x = x_ref[...]                                               # (tile_b, in) bf16
    h1 = jnp.dot(x, w1_ref[...], preferred_element_type=jnp.float32) + b1_ref[...]
    h1 = jnp.maximum(h1, 0.0)
    h2 = jnp.dot(h1.astype(jnp.bfloat16), w2_ref[...],
                 preferred_element_type=jnp.float32) + b2_ref[...]
    h2 = jnp.maximum(h2, 0.0)
    out = jnp.dot(h2.astype(jnp.bfloat16), w3_ref[...],
                  preferred_element_type=jnp.float32) + b3_ref[...]
    out_ref[...] = out.astype(out_ref.dtype)


def _round_up(n, m):
    return ((n + m - 1) // m) * m


@partial(jax.jit, static_argnames=("num_outputs",))
def dqn_forward(x, params, *, num_outputs=NUM_OUTPUTS):
    """x: (batch, num_inputs) float. Returns (batch, num_outputs) f32 Q-values."""
    w1, b1, w2, b2, w3, b3 = params
    batch, in_feat = x.shape

    # Batch tiling: large tiles amortize per-grid-step overhead, but keep at
    # least two tiles once the batch is big enough so the "parallel" batch axis
    # can shard across both v7x TensorCores (no-op on single-TC v5e/v6e).
    b_ru = _round_up(batch, SUBLANE)
    if b_ru >= 2 * MAX_TILE_B:
        tile_b = MAX_TILE_B
    elif b_ru >= 1024:
        tile_b = _round_up((b_ru + 1) // 2, SUBLANE)
    else:
        tile_b = b_ru
    b_pad = _round_up(b_ru, tile_b)

    # Ship activations bf16; pad only the batch dim (no lane padding of x).
    x_bf = x.astype(jnp.bfloat16)
    if b_pad != batch:
        x_bf = jnp.pad(x_bf, ((0, b_pad - batch), (0, 0)))

    resident = lambda i: (0, 0)   # weights/biases: DMA'd once, VMEM-resident

    out_pad = pl.pallas_call(
        dqn_kernel,
        out_shape=jax.ShapeDtypeStruct((b_pad, num_outputs), jnp.float32),
        grid=(b_pad // tile_b,),
        in_specs=[
            pl.BlockSpec((tile_b, in_feat), lambda i: (i, 0)),     # activations
            pl.BlockSpec((in_feat, HID_PAD), resident),            # w1
            pl.BlockSpec((1, HID_PAD), resident),                  # b1
            pl.BlockSpec((HID_PAD, HID_PAD), resident),            # w2
            pl.BlockSpec((1, HID_PAD), resident),                  # b2
            pl.BlockSpec((HID_PAD, num_outputs), resident),        # w3
            pl.BlockSpec((1, num_outputs), resident),              # b3
        ],
        out_specs=pl.BlockSpec((tile_b, num_outputs), lambda i: (i, 0)),
        compiler_params=pltpu.CompilerParams(
            dimension_semantics=("parallel",),  # batch tiles -> both TCs on v7x
        ),
    )(x_bf, w1, b1, w2, b2, w3, b3)

    return out_pad[:batch]


def init_dqn_params(key, num_inputs, num_outputs=NUM_OUTPUTS, hidden=HIDDEN):
    """PyTorch nn.Linear-style init (U[-1/sqrt(fan_in), 1/sqrt(fan_in)]).

    Weights stored (fan_in, fan_out_padded) [transposed vs torch] in bf16;
    biases (1, fan_out_padded) f32.  Only the hidden dim is zero-padded to 128
    lanes; padded rows/columns are zero so they never contaminate real outputs.
    """
    ks = jax.random.split(key, 6)

    def linear(kw, kb, fan_in, fan_out, in_dim, out_dim):
        bound = 1.0 / math.sqrt(fan_in)
        w = jax.random.uniform(kw, (fan_in, fan_out), jnp.float32, -bound, bound)
        b = jax.random.uniform(kb, (1, fan_out), jnp.float32, -bound, bound)
        w_p = jnp.zeros((in_dim, out_dim), jnp.float32).at[:fan_in, :fan_out].set(w)
        b_p = jnp.zeros((1, out_dim), jnp.float32).at[:, :fan_out].set(b)
        return w_p.astype(jnp.bfloat16), b_p

    w1, b1 = linear(ks[0], ks[1], num_inputs, hidden, num_inputs, HID_PAD)
    w2, b2 = linear(ks[2], ks[3], hidden, hidden, HID_PAD, HID_PAD)
    w3, b3 = linear(ks[4], ks[5], hidden, num_outputs, HID_PAD, num_outputs)
    return (w1, b1, w2, b2, w3, b3)


def dqn_reference(x, params, num_inputs, num_outputs=NUM_OUTPUTS, hidden=HIDDEN):
    """Plain-JAX reference with the same bf16-operand / f32-accumulate math."""
    # TODO(synk): matches torch fp32 only to bf16-operand precision (~1e-2 rel worst case).
    w1, b1, w2, b2, w3, b3 = params
    h = jnp.dot(x.astype(jnp.bfloat16), w1[:num_inputs, :hidden],
                preferred_element_type=jnp.float32) + b1[0, :hidden]
    h = jnp.maximum(h, 0.0)
    h = jnp.dot(h.astype(jnp.bfloat16), w2[:hidden, :hidden],
                preferred_element_type=jnp.float32) + b2[0, :hidden]
    h = jnp.maximum(h, 0.0)
    return jnp.dot(h.astype(jnp.bfloat16), w3[:hidden, :num_outputs],
                   preferred_element_type=jnp.float32) + b3[0, :num_outputs]


if __name__ == "__main__":
    key = jax.random.PRNGKey(0)
    k_small, k_big, k_params = jax.random.split(key, 3)

    num_inputs, num_outputs = 4, 2   # CartPole-style observation / action dims
    params = init_dqn_params(k_params, num_inputs, num_outputs)

    # Small shape consistent with the module: one 8-row tile, single grid step.
    x_small = jax.random.normal(k_small, (8, num_inputs), dtype=jnp.float32)
    out_small = dqn_forward(x_small, params)
    jax.block_until_ready(out_small)
    ref_small = dqn_reference(x_small, params, num_inputs)
    assert out_small.shape == (8, num_outputs)
    assert jnp.allclose(out_small, ref_small, atol=1e-3, rtol=1e-3)

    # Larger batch exercises the multi-tile pipelined path (2 tiles of 512 rows,
    # resident weights, "parallel" batch axis -> both v7x TensorCores).
    x_big = jax.random.normal(k_big, (1024, num_inputs), dtype=jnp.float32)
    out_big = dqn_forward(x_big, params)
    jax.block_until_ready(out_big)
    ref_big = dqn_reference(x_big, params, num_inputs)
    assert out_big.shape == (1024, num_outputs)
    assert jnp.allclose(out_big, ref_big, atol=1e-3, rtol=1e-3)

    print("KERNEL_OK")
</pallas_src>

<mosaic_0001>
module attributes {stable_mosaic.version = 11 : i64} {
  func.func @dqn_kernel(%arg0: i32, %arg1: memref<8x4xbf16, #tpu.memory_space<vmem>>, %arg2: memref<4x128xbf16, #tpu.memory_space<vmem>>, %arg3: memref<1x128xf32, #tpu.memory_space<vmem>>, %arg4: memref<128x128xbf16, #tpu.memory_space<vmem>>, %arg5: memref<1x128xf32, #tpu.memory_space<vmem>>, %arg6: memref<128x2xbf16, #tpu.memory_space<vmem>>, %arg7: memref<1x2xf32, #tpu.memory_space<vmem>>, %arg8: memref<8x2xf32, #tpu.memory_space<vmem>>) attributes {dimension_semantics = [#tpu.dimension_semantics<parallel>], iteration_bounds = array<i64: 1>, scalar_prefetch = 0 : i64, scratch_operands = 0 : i64, tpu.core_type = #tpu.core_type<tc>, window_params = [{transform_indices = @transform_0, window_bounds = array<i64: 8, 4>}, {pipeline_mode = #tpu.pipeline_mode<synchronous>, transform_indices = @transform_1, window_bounds = array<i64: 4, 128>}, {pipeline_mode = #tpu.pipeline_mode<synchronous>, transform_indices = @transform_2, window_bounds = array<i64: 1, 128>}, {pipeline_mode = #tpu.pipeline_mode<synchronous>, transform_indices = @transform_3, window_bounds = array<i64: 128, 128>}, {pipeline_mode = #tpu.pipeline_mode<synchronous>, transform_indices = @transform_4, window_bounds = array<i64: 1, 128>}, {pipeline_mode = #tpu.pipeline_mode<synchronous>, transform_indices = @transform_5, window_bounds = array<i64: 128, 2>}, {pipeline_mode = #tpu.pipeline_mode<synchronous>, transform_indices = @transform_6, window_bounds = array<i64: 1, 2>}, {transform_indices = @transform_7, window_bounds = array<i64: 8, 2>}]} {
    %c0 = arith.constant 0 : index
    %c0_0 = arith.constant 0 : index
    %0 = vector.load %arg1[%c0, %c0_0] : memref<8x4xbf16, #tpu.memory_space<vmem>>, vector<8x4xbf16>
    %c0_1 = arith.constant 0 : index
    %c0_2 = arith.constant 0 : index
    %1 = vector.load %arg2[%c0_1, %c0_2] : memref<4x128xbf16, #tpu.memory_space<vmem>>, vector<4x128xbf16>
    %cst = arith.constant dense<0.000000e+00> : vector<8x128xf32>
    %2 = tpu.matmul %0, %1, %cst {dimension_numbers = #tpu.dot_dimension_numbers<[1], [0], [0], [1], [0, 0, 1, 1], [], []>} : vector<8x4xbf16>, vector<4x128xbf16>, vector<8x128xf32> -> vector<8x128xf32>
    %c0_3 = arith.constant 0 : index
    %c0_4 = arith.constant 0 : index
    %3 = vector.load %arg3[%c0_3, %c0_4] : memref<1x128xf32, #tpu.memory_space<vmem>>, vector<1x128xf32>
    %4 = vector.broadcast %3 : vector<1x128xf32> to vector<8x128xf32>
    %5 = arith.addf %2, %4 : vector<8x128xf32>
    %cst_5 = arith.constant 0.000000e+00 : f32
    %6 = vector.broadcast %cst_5 : f32 to vector<8x128xf32>
    %7 = arith.maximumf %5, %6 : vector<8x128xf32>
    %8 = arith.truncf %7 : vector<8x128xf32> to vector<8x128xbf16>
    %c0_6 = arith.constant 0 : index
    %c0_7 = arith.constant 0 : index
    %9 = vector.load %arg4[%c0_6, %c0_7] : memref<128x128xbf16, #tpu.memory_space<vmem>>, vector<128x128xbf16>
    %cst_8 = arith.constant dense<0.000000e+00> : vector<8x128xf32>
    %10 = tpu.matmul %8, %9, %cst_8 {dimension_numbers = #tpu.dot_dimension_numbers<[1], [0], [0], [1], [0, 0, 1, 1], [], []>} : vector<8x128xbf16>, vector<128x128xbf16>, vector<8x128xf32> -> vector<8x128xf32>
    %c0_9 = arith.constant 0 : index
    %c0_10 = arith.constant 0 : index
    %11 = vector.load %arg5[%c0_9, %c0_10] : memref<1x128xf32, #tpu.memory_space<vmem>>, vector<1x128xf32>
    %12 = vector.broadcast %11 : vector<1x128xf32> to vector<8x128xf32>
    %13 = arith.addf %10, %12 : vector<8x128xf32>
    %cst_11 = arith.constant 0.000000e+00 : f32
    %14 = vector.broadcast %cst_11 : f32 to vector<8x128xf32>
    %15 = arith.maximumf %13, %14 : vector<8x128xf32>
    %16 = arith.truncf %15 : vector<8x128xf32> to vector<8x128xbf16>
    %c0_12 = arith.constant 0 : index
    %c0_13 = arith.constant 0 : index
    %17 = vector.load %arg6[%c0_12, %c0_13] : memref<128x2xbf16, #tpu.memory_space<vmem>>, vector<128x2xbf16>
    %cst_14 = arith.constant dense<0.000000e+00> : vector<8x2xf32>
    %18 = tpu.matmul %16, %17, %cst_14 {dimension_numbers = #tpu.dot_dimension_numbers<[1], [0], [0], [1], [0, 0, 1, 1], [], []>} : vector<8x128xbf16>, vector<128x2xbf16>, vector<8x2xf32> -> vector<8x2xf32>
    %c0_15 = arith.constant 0 : index
    %c0_16 = arith.constant 0 : index
    %19 = vector.load %arg7[%c0_15, %c0_16] : memref<1x2xf32, #tpu.memory_space<vmem>>, vector<1x2xf32>
    %20 = vector.broadcast %19 : vector<1x2xf32> to vector<8x2xf32>
    %21 = arith.addf %18, %20 : vector<8x2xf32>
    %c0_17 = arith.constant 0 : index
    %c0_18 = arith.constant 0 : index
    %22 = vector.load %arg8[%c0_17, %c0_18] : memref<8x2xf32, #tpu.memory_space<vmem>>, vector<8x2xf32>
    tpu.vector_store %arg8[%c0_17, %c0_18], %21 {strides = array<i32>} : memref<8x2xf32, #tpu.memory_space<vmem>>, vector<8x2xf32>,
    return
  }
  func.func @transform_0(%arg0: i32) -> (i32, i32) {
    %c0_i32 = arith.constant 0 : i32
    %c0_i32_0 = arith.constant 0 : i32
    return %arg0, %c0_i32 : i32, i32
  }
  func.func @transform_1(%arg0: i32) -> (i32, i32) {
    %c0_i32 = arith.constant 0 : i32
    %c0_i32_0 = arith.constant 0 : i32
    %c0_i32_1 = arith.constant 0 : i32
    return %c0_i32, %c0_i32_0 : i32, i32
  }
  func.func @transform_2(%arg0: i32) -> (i32, i32) {
    %c0_i32 = arith.constant 0 : i32
    %c0_i32_0 = arith.constant 0 : i32
    %c0_i32_1 = arith.constant 0 : i32
    return %c0_i32, %c0_i32_0 : i32, i32
  }
  func.func @transform_3(%arg0: i32) -> (i32, i32) {
    %c0_i32 = arith.constant 0 : i32
    %c0_i32_0 = arith.constant 0 : i32
    %c0_i32_1 = arith.constant 0 : i32
    return %c0_i32, %c0_i32_0 : i32, i32
  }
  func.func @transform_4(%arg0: i32) -> (i32, i32) {
    %c0_i32 = arith.constant 0 : i32
    %c0_i32_0 = arith.constant 0 : i32
    %c0_i32_1 = arith.constant 0 : i32
    return %c0_i32, %c0_i32_0 : i32, i32
  }
  func.func @transform_5(%arg0: i32) -> (i32, i32) {
    %c0_i32 = arith.constant 0 : i32
    %c0_i32_0 = arith.constant 0 : i32
    %c0_i32_1 = arith.constant 0 : i32
    return %c0_i32, %c0_i32_0 : i32, i32
  }
  func.func @transform_6(%arg0: i32) -> (i32, i32) {
    %c0_i32 = arith.constant 0 : i32
    %c0_i32_0 = arith.constant 0 : i32
    %c0_i32_1 = arith.constant 0 : i32
    return %c0_i32, %c0_i32_0 : i32, i32
  }
  func.func @transform_7(%arg0: i32) -> (i32, i32) {
    %c0_i32 = arith.constant 0 : i32
    %c0_i32_0 = arith.constant 0 : i32
    return %arg0, %c0_i32 : i32, i32
  }
}

</mosaic_0001>

<llo_original>
// kernel: dqn_forward.1
$region0: #{dqn_forward.1}
  #allocation0 [shape = 'u32[]', space=smem, size = 0x4, offset = 0x4, fixed_abs, tag = 'smem constant byte address 0x4 - core index']
  #allocation1 [shape = 'u32[144,128]{1,0:T(1,128)}', space=vmem, size = 0x12000, scoped, tag = 'internal scratch']
  %s0 = inlined_call_operand.vmem [shape: bf16[8,4], index: 0, kind: input, shape index: {}]
  %s1 = inlined_call_operand.vmem [shape: bf16[4,128], index: 1, kind: input, shape index: {}]
  %s2 = inlined_call_operand.vmem [shape: f32[1,128], index: 2, kind: input, shape index: {}]
  %s3 = inlined_call_operand.vmem [shape: bf16[128,128], index: 3, kind: input, shape index: {}]
  %s4 = inlined_call_operand.vmem [shape: f32[1,128], index: 4, kind: input, shape index: {}]
  %s5 = inlined_call_operand.vmem [shape: bf16[128,2], index: 5, kind: input, shape index: {}]
  %s6 = inlined_call_operand.vmem [shape: f32[1,2], index: 6, kind: input, shape index: {}]
  %s7 = inlined_call_operand.vmem [shape: f32[8,2], index: 7, kind: output, shape index: {}]
  %s8 = sld [smem:[#allocation0]]
  $region38: #{dqn_forward.1} parent=0
    _
  %s10 = ssub.s32 1, %s8
  %s11 = scalar_select 0, %s10, %s8
  // Predicated region
  $region2: #{dqn_forward.1} parent=0 // pred_check
    _
  $region3: #{dqn_forward.1} parent=0 // pred_check_branch
    %13 = sbr.rel (0) target = $region5
  $region4: #{dqn_forward.1} parent=0 // pred_region
    _
  $region5: #{dqn_forward.1} parent=0 // pred_fallthru
    _
  // Predicated region
  $region6: #{dqn_forward.1} parent=0 // pred_check
    _
  $region7: #{dqn_forward.1} parent=0 // pred_check_branch
    %15 = sbr.rel (0) target = $region9
  $region8: #{dqn_forward.1} parent=0 // pred_region
    _
  $region9: #{dqn_forward.1} parent=0 // pred_fallthru
    _
  // Predicated region
  $region10: #{dqn_forward.1} parent=0 // pred_check
    _
  $region11: #{dqn_forward.1} parent=0 // pred_check_branch
    %17 = sbr.rel (0) target = $region13
  $region12: #{dqn_forward.1} parent=0 // pred_region
    _
  $region13: #{dqn_forward.1} parent=0 // pred_fallthru
    _
  // Predicated region
  $region14: #{dqn_forward.1} parent=0 // pred_check
    _
  $region15: #{dqn_forward.1} parent=0 // pred_check_branch
    %19 = sbr.rel (0) target = $region17
  $region16: #{dqn_forward.1} parent=0 // pred_region
    _
  $region17: #{dqn_forward.1} parent=0 // pred_fallthru
    _
  // Predicated region
  $region18: #{dqn_forward.1} parent=0 // pred_check
    _
  $region19: #{dqn_forward.1} parent=0 // pred_check_branch
    %21 = sbr.rel (0) target = $region21
  $region20: #{dqn_forward.1} parent=0 // pred_region
    _
  $region21: #{dqn_forward.1} parent=0 // pred_fallthru
    _
  // Predicated region
  $region22: #{dqn_forward.1} parent=0 // pred_check
    _
  $region23: #{dqn_forward.1} parent=0 // pred_check_branch
    %23 = sbr.rel (0) target = $region25
  $region24: #{dqn_forward.1} parent=0 // pred_region
    _
  $region25: #{dqn_forward.1} parent=0 // pred_fallthru
    _
  // Predicated region
  $region26: #{dqn_forward.1} parent=0 // pred_check
    _
  $region27: #{dqn_forward.1} parent=0 // pred_check_branch
    %25 = sbr.rel (0) target = $region29
  $region28: #{dqn_forward.1} parent=0 // pred_region
    _
  $region29: #{dqn_forward.1} parent=0 // pred_fallthru
    _
  %v27 = vld [vmem:[%s0] sm:$0xf]
  %v28 = vld [vmem:[%s1] sm:$0x3]
  %v29 = vld [vmem:[%s2] sm:$0x1]
  %v31 = vlaneseq
  %v32 = vshrl.u32 %v31, 7
  %v33 = vsub.s32 0, %v32
  %v34 = vrot.slane %v29, %v33
  %vm36 = vcmask 31744
  %v38 = vsel %vm36, %v27, 0
  %vm40 = vcmask 1041408
  %v42 = vsel %vm40, %v28, 0
  %44 = vmatprep.subr.bf16.mxu0 0
  %45 = vmatpush1.bf16.msra.mxu0 %v42
  %46 = vmatprep.subr.bf16.mxu0 0
  %47 = vmatpush1.bf16.msra.mxu0 0
  %48 = vmatprep.subr.bf16.mxu0 0
  %49 = vmatpush1.bf16.msra.mxu0 0
  %50 = vmatprep.subr.bf16.mxu0 0
  %51 = vmatpush1.bf16.msra.mxu0 0
  %52 = vmatprep.subr.bf16.mxu0 0
  %53 = vmatpush1.bf16.msra.mxu0 0
  %54 = vmatprep.subr.bf16.mxu0 0
  %55 = vmatpush1.bf16.msra.mxu0 0
  %56 = vmatprep.subr.bf16.mxu0 0
  %57 = vmatpush1.bf16.msra.mxu0 0
  %58 = vmatprep.subr.bf16.mxu0 0
  %59 = vmatpush1.bf16.msra.mxu0 0
  %60 = vmatprep.subr.bf16.mxu0 0
  %61 = vmatpush1.bf16.msra.mxu0 0
  %62 = vmatprep.subr.bf16.mxu0 0
  %63 = vmatpush1.bf16.msra.mxu0 0
  %64 = vmatprep.subr.bf16.mxu0 0
  %65 = vmatpush1.bf16.msra.mxu0 0
  %66 = vmatprep.subr.bf16.mxu0 0
  %67 = vmatpush1.bf16.msra.mxu0 0
  %68 = vmatprep.subr.bf16.mxu0 0
  %69 = vmatpush1.bf16.msra.mxu0 0
  %70 = vmatprep.subr.bf16.mxu0 0
  %71 = vmatpush1.bf16.msra.mxu0 0
  %72 = vmatprep.subr.bf16.mxu0 0
  %73 = vmatpush1.bf16.msra.mxu0 0
  %74 = vmatprep.subr.bf16.mxu0 0
  %75 = vmatpush1.bf16.msra.mxu0 0
  %76 = vmatprep.mubr.bf16.mxu0 0
  %77 = vmatmul.mubr.bf16.gmra.mrb[0].mxu0 %v38
  %v78 = vpop.f32.mrb[0].mxu0
  %v79 = vadd.f32 %v34, %v78
  %v80 = vpop.f32.mrb[0].mxu0
  %v81 = vpop.f32.mrb[0].mxu0
  %v82 = vpop.f32.mrb[0].mxu0
  %83 = vdwg.mxu0
  %v84 = vmax.f32 %v79, 0.0
  %v85 = vpack.c.bf16 %v84, %v84
  %v86 = vld [vmem:[%s3] sm:$0xf]
  %v87 = vld [vmem:[%s3 + $0x4] sm:$0xf]
  %v88 = vld [vmem:[%s3 + $0x8] sm:$0xf]
  %v89 = vld [vmem:[%s3 + $0xc] sm:$0xf]
  %v90 = vld [vmem:[%s3 + $0x10] sm:$0xf]
  %v91 = vld [vmem:[%s3 + $0x14] sm:$0xf]
  %v92 = vld [vmem:[%s3 + $0x18] sm:$0xf]
  %v93 = vld [vmem:[%s3 + $0x1c] sm:$0xf]
  %v94 = vld [vmem:[%s3 + $0x20] sm:$0xf]
  %v95 = vld [vmem:[%s3 + $0x24] sm:$0xf]
  %v96 = vld [vmem:[%s3 + $0x28] sm:$0xf]
  %v97 = vld [vmem:[%s3 + $0x2c] sm:$0xf]
  %v98 = vld [vmem:[%s3 + $0x30] sm:$0xf]
  %v99 = vld [vmem:[%s3 + $0x34] sm:$0xf]
  %v100 = vld [vmem:[%s3 + $0x38] sm:$0xf]
  %v101 = vld [vmem:[%s3 + $0x3c] sm:$0xf]
  %v102 = vld [vmem:[%s4] sm:$0x1]
  %v104 = vlaneseq
  %v105 = vshrl.u32 %v104, 7
  %v106 = vsub.s32 0, %v105
  %v107 = vrot.slane %v102, %v106
  %v125 = vunpack.c.l.b16 %v86
  %v126 = vunpack.c.l.b16 %v87
  %v127 = vunpack.c.l.b16 %v88
  %v128 = vunpack.c.l.b16 %v89
  %v129 = vunpack.c.l.b16 %v90
  %v130 = vunpack.c.l.b16 %v91
  %v131 = vunpack.c.l.b16 %v92
  %v132 = vunpack.c.l.b16 %v93
  %v133 = vunpack.c.l.b16 %v94
  %v134 = vunpack.c.l.b16 %v95
  %v135 = vunpack.c.l.b16 %v96
  %v136 = vunpack.c.l.b16 %v97
  %v137 = vunpack.c.l.b16 %v98
  %v138 = vunpack.c.l.b16 %v99
  %v139 = vunpack.c.l.b16 %v100
  %v140 = vunpack.c.l.b16 %v101
  %v141 = vpack.c.b16 %v126, %v125
  %v142 = vpack.c.b16 %v128, %v127
  %v143 = vpack.c.b16 %v130, %v129
  %v144 = vpack.c.b16 %v132, %v131
  %v145 = vpack.c.b16 %v134, %v133
  %v146 = vpack.c.b16 %v136, %v135
  %v147 = vpack.c.b16 %v138, %v137
  %v148 = vpack.c.b16 %v140, %v139
  %157 = vmatprep.subr.bf16.mxu0 0
  %158 = vmatpush1.bf16.msra.mxu0 %v141
  %159 = vmatprep.subr.bf16.mxu0 0
  %160 = vmatpush1.bf16.msra.mxu0 %v142
  %161 = vmatprep.subr.bf16.mxu0 0
  %162 = vmatpush1.bf16.msra.mxu0 %v143
  %163 = vmatprep.subr.bf16.mxu0 0
  %164 = vmatpush1.bf16.msra.mxu0 %v144
  %165 = vmatprep.subr.bf16.mxu0 0
  %166 = vmatpush1.bf16.msra.mxu0 %v145
  %167 = vmatprep.subr.bf16.mxu0 0
  %168 = vmatpush1.bf16.msra.mxu0 %v146
  %169 = vmatprep.subr.bf16.mxu0 0
  %170 = vmatpush1.bf16.msra.mxu0 %v147
  %171 = vmatprep.subr.bf16.mxu0 0
  %172 = vmatpush1.bf16.msra.mxu0 %v148
  %173 = vmatprep.subr.bf16.mxu0 0
  %174 = vmatpush1.bf16.msra.mxu0 0
  %175 = vmatprep.subr.bf16.mxu0 0
  %176 = vmatpush1.bf16.msra.mxu0 0
  %177 = vmatprep.subr.bf16.mxu0 0
  %178 = vmatpush1.bf16.msra.mxu0 0
  %179 = vmatprep.subr.bf16.mxu0 0
  %180 = vmatpush1.bf16.msra.mxu0 0
  %181 = vmatprep.subr.bf16.mxu0 0
  %182 = vmatpush1.bf16.msra.mxu0 0
  %183 = vmatprep.subr.bf16.mxu0 0
  %184 = vmatpush1.bf16.msra.mxu0 0
  %185 = vmatprep.subr.bf16.mxu0 0
  %186 = vmatpush1.bf16.msra.mxu0 0
  %187 = vmatprep.subr.bf16.mxu0 0
  %188 = vmatpush1.bf16.msra.mxu0 0
  %189 = vmatprep.mubr.bf16.mxu0 0
  %190 = vmatmul.mubr.bf16.gmra.mrb[0].mxu0 %v85
  %v191 = vpop.f32.mrb[0].mxu0
  %v192 = vadd.f32 %v107, %v191
  %v193 = vpop.f32.mrb[0].mxu0
  %v194 = vpop.f32.mrb[0].mxu0
  %v195 = vpop.f32.mrb[0].mxu0
  %196 = vdwg.mxu0
  %v197 = vmax.f32 %v192, 0.0
  %v198 = vpack.c.bf16 %v197, %v197
  %v199 = vld [vmem:[%s5] sm:$0xf]
  %v200 = vld [vmem:[%s5 + $0x4] sm:$0xf]
  %v201 = vld [vmem:[%s5 + $0x8] sm:$0xf]
  %v202 = vld [vmem:[%s5 + $0xc] sm:$0xf]
  %v203 = vld [vmem:[%s5 + $0x10] sm:$0xf]
  %v204 = vld [vmem:[%s5 + $0x14] sm:$0xf]
  %v205 = vld [vmem:[%s5 + $0x18] sm:$0xf]
  %v206 = vld [vmem:[%s5 + $0x1c] sm:$0xf]
  %v207 = vld [vmem:[%s5 + $0x20] sm:$0xf]
  %v208 = vld [vmem:[%s5 + $0x24] sm:$0xf]
  %v209 = vld [vmem:[%s5 + $0x28] sm:$0xf]
  %v210 = vld [vmem:[%s5 + $0x2c] sm:$0xf]
  %v211 = vld [vmem:[%s5 + $0x30] sm:$0xf]
  %v212 = vld [vmem:[%s5 + $0x34] sm:$0xf]
  %v213 = vld [vmem:[%s5 + $0x38] sm:$0xf]
  %v214 = vld [vmem:[%s5 + $0x3c] sm:$0xf]
  %v215 = vld [vmem:[%s6] sm:$0x1]
  %v217 = vlaneseq
  %v218 = vshrl.u32 %v217, 7
  %v219 = vsub.s32 0, %v218
  %v220 = vrot.slane %v215, %v219
  %v238 = vunpack.c.l.b16 %v199
  %v239 = vunpack.c.l.b16 %v200
  %v240 = vunpack.c.l.b16 %v201
  %v241 = vunpack.c.l.b16 %v202
  %v242 = vunpack.c.l.b16 %v203
  %v243 = vunpack.c.l.b16 %v204
  %v244 = vunpack.c.l.b16 %v205
  %v245 = vunpack.c.l.b16 %v206
  %v246 = vunpack.c.l.b16 %v207
  %v247 = vunpack.c.l.b16 %v208
  %v248 = vunpack.c.l.b16 %v209
  %v249 = vunpack.c.l.b16 %v210
  %v250 = vunpack.c.l.b16 %v211
  %v251 = vunpack.c.l.b16 %v212
  %v252 = vunpack.c.l.b16 %v213
  %v253 = vunpack.c.l.b16 %v214
  %v254 = vpack.c.b16 %v239, %v238
  %v255 = vpack.c.b16 %v241, %v240
  %v256 = vpack.c.b16 %v243, %v242
  %v257 = vpack.c.b16 %v245, %v244
  %v258 = vpack.c.b16 %v247, %v246
  %v259 = vpack.c.b16 %v249, %v248
  %v260 = vpack.c.b16 %v251, %v250
  %v261 = vpack.c.b16 %v253, %v252
  %270 = vmatprep.subr.bf16.mxu0 0
  %271 = vmatpush1.bf16.msra.mxu0 %v254
  %272 = vmatprep.subr.bf16.mxu0 0
  %273 = vmatpush1.bf16.msra.mxu0 %v255
  %274 = vmatprep.subr.bf16.mxu0 0
  %275 = vmatpush1.bf16.msra.mxu0 %v256
  %276 = vmatprep.subr.bf16.mxu0 0
  %277 = vmatpush1.bf16.msra.mxu0 %v257
  %278 = vmatprep.subr.bf16.mxu0 0
  %279 = vmatpush1.bf16.msra.mxu0 %v258
  %280 = vmatprep.subr.bf16.mxu0 0
  %281 = vmatpush1.bf16.msra.mxu0 %v259
  %282 = vmatprep.subr.bf16.mxu0 0
  %283 = vmatpush1.bf16.msra.mxu0 %v260
  %284 = vmatprep.subr.bf16.mxu0 0
  %285 = vmatpush1.bf16.msra.mxu0 %v261
  %286 = vmatprep.subr.bf16.mxu0 0
  %287 = vmatpush1.bf16.msra.mxu0 0
  %288 = vmatprep.subr.bf16.mxu0 0
  %289 = vmatpush1.bf16.msra.mxu0 0
  %290 = vmatprep.subr.bf16.mxu0 0
  %291 = vmatpush1.bf16.msra.mxu0 0
  %292 = vmatprep.subr.bf16.mxu0 0
  %293 = vmatpush1.bf16.msra.mxu0 0
  %294 = vmatprep.subr.bf16.mxu0 0
  %295 = vmatpush1.bf16.msra.mxu0 0
  %296 = vmatprep.subr.bf16.mxu0 0
  %297 = vmatpush1.bf16.msra.mxu0 0
  %298 = vmatprep.subr.bf16.mxu0 0
  %299 = vmatpush1.bf16.msra.mxu0 0
  %300 = vmatprep.subr.bf16.mxu0 0
  %301 = vmatpush1.bf16.msra.mxu0 0
  %302 = vmatprep.mubr.bf16.mxu0 0
  %303 = vmatmul.mubr.bf16.gmra.mrb[0].mxu0 %v198
  %v304 = vpop.f32.mrb[0].mxu0
  %v305 = vadd.f32 %v220, %v304
  %v306 = vpop.f32.mrb[0].mxu0
  %v307 = vpop.f32.mrb[0].mxu0
  %v308 = vpop.f32.mrb[0].mxu0
  %309 = vdwg.mxu0
  %vm310 = vcmask 15360
  %311 = vst.msk [vmem:[%s7] sm:$0xff] %vm310, %v305
  // Predicated region
  $region30: #{dqn_forward.1} parent=0 // pred_check
    _
  $region31: #{dqn_forward.1} parent=0 // pred_check_branch
    %313 = sbr.rel (0) target = $region33
  $region32: #{dqn_forward.1} parent=0 // pred_region
    _
  $region33: #{dqn_forward.1} parent=0 // pred_fallthru
    _
  // Predicated region
  $region34: #{dqn_forward.1} parent=0 // pred_check
    _
  $region35: #{dqn_forward.1} parent=0 // pred_check_branch
    %315 = sbr.rel (0) target = $region37
  $region36: #{dqn_forward.1} parent=0 // pred_region
    _
  $region37: #{dqn_forward.1} parent=0 // pred_fallthru
    _

</llo_original>
